<compile_context>
chip_gen: v6e
topology: v6e:2x2x1
jax: 0.10.0
libtpu: 0.0.40
codegen_flags: <defaults>
</compile_context>

<pallas_src>
import functools

import jax
import jax.numpy as jnp
import numpy as np
from jax.experimental import pallas as pl
from jax.experimental.pallas import tpu as pltpu

EPS = 1e-5  # nn.BatchNorm2d default eps


def _round_up(x, m):
    return (x + m - 1) // m * m


@functools.lru_cache(maxsize=None)
def _probe_roll_mode():
    """One-time probe of pltpu.roll: 'fwd' if np.roll semantics (out[i]=in[i-shift]),
    'bwd' if the opposite rotation, None if roll is unavailable (fall back to jnp.roll).
    Keeps the conv tap indexing correct across jax/Mosaic versions."""
    def k(x_ref, o_ref):
        o_ref[...] = pltpu.roll(x_ref[...], shift=1, axis=1)

    x = jnp.arange(8 * 128, dtype=jnp.float32).reshape(8, 128)
    try:
        y = pl.pallas_call(
            k,
            out_shape=jax.ShapeDtypeStruct((8, 128), jnp.float32),
            in_specs=[pl.BlockSpec(memory_space=pltpu.MemorySpace.VMEM)],
            out_specs=pl.BlockSpec(memory_space=pltpu.MemorySpace.VMEM),
        )(x)
        return "fwd" if bool(y[0, 1] == 0.0) else "bwd"
    except Exception:  # noqa: BLE001 -- any lowering/runtime issue -> jnp.roll fallback
        return None


def _two_convs_kernel(N, H, W, S_pad, im2col1, im2col2, roll_mode,
                      x_ref, mask_ref,
                      w1_ref, g1_ref, bt1_ref,
                      w2_ref, g2_ref, bt2_ref,
                      out_ref):
    Wp = W + 2
    L = N * S_pad
    cnt = float(N * H * W)
    m = mask_ref[...]                                   # (1, L): 1.0 on valid output lanes

    def shifted(src, delta):
        # shifted[:, p] = src[:, p + delta]  (circular).  Whole-buffer lane roll on the
        # XLU; circular bleed only lands on masked pad/tail lanes because every per-image
        # S_pad block is self-contained for valid output columns (|delta| <= Wp+1).
        if delta == 0:
            return src
        if roll_mode == "fwd":
            return pltpu.roll(src, shift=(-delta) % L, axis=1)
        if roll_mode == "bwd":
            return pltpu.roll(src, shift=delta % L, axis=1)
        return jnp.roll(src, -delta, axis=1)            # fallback lowering

    def conv3x3(src, w_ref, use_im2col):
        # "same" 3x3 conv in the padded layout: out[p] = sum_t w_t @ src[p + delta_t],
        # delta_t = (dy-1)*Wp + (dx-1).  Rolls happen in f32; MXU operands are cast to
        # bf16; accumulation is f32.
        deltas = [(t // 3 - 1) * Wp + (t % 3 - 1) for t in range(9)]
        if use_im2col:
            # tiny channel counts: one matmul with K = 9*Cin_p
            col = jnp.concatenate([shifted(src, d) for d in deltas], axis=0)
            return jnp.dot(w_ref[...], col.astype(jnp.bfloat16),
                           preferred_element_type=jnp.float32)
        # larger channel counts: 9 accumulated tap matmuls, no 9x im2col copy in VMEM
        w = w_ref[...]                                  # (9, Cout_p, Cin_p) bf16
        acc = None
        for t, d in enumerate(deltas):
            part = jnp.dot(w[t], shifted(src, d).astype(jnp.bfloat16),
                           preferred_element_type=jnp.float32)
            acc = part if acc is None else acc + part
        return acc

    def bn_relu(y, g_ref, bt_ref, mask_out):
        # Training-mode BatchNorm2d (biased batch stats over N,H,W): single pass over the
        # masked columns, then scale/shift + ReLU.  All statistics / normalization in f32.
        mb = jnp.broadcast_to(m, y.shape)               # broadcast once, reused below
        ym = y * mb
        s1 = jnp.sum(ym, axis=1, keepdims=True)         # sum(y * m)
        s2 = jnp.sum(ym * ym, axis=1, keepdims=True)    # sum(y^2 * m)   (m is 0/1)
        mean = s1 / cnt
        var = jnp.maximum(s2 / cnt - mean * mean, 0.0)  # clamp: cancellation safety
        yn = (y - mean) * jax.lax.rsqrt(var + EPS)
        out = jnp.maximum(yn * g_ref[...] + bt_ref[...], 0.0)
        # mask_out=True zeroes the pad ring / tail lanes so they serve as conv2's "same"
        # zero padding; the final layer skips it (the wrapper slices those lanes off).
        return out * mb if mask_out else out

    # conv1 -> BN1 -> ReLU   (conv bias omitted: cancels in the BN mean subtraction)
    h1 = bn_relu(conv3x3(x_ref[...].astype(jnp.float32), w1_ref, im2col1),
                 g1_ref, bt1_ref, mask_out=True)        # (Cmid_p, L) f32, pad lanes == 0
    # conv2 -> BN2 -> ReLU
    out_ref[...] = bn_relu(conv3x3(h1, w2_ref, im2col2),
                           g2_ref, bt2_ref, mask_out=False)


def two_convs_pallas(x_nchw, params):
    # params in PyTorch layout: conv weights (Cout, Cin, 3, 3), conv biases (Cout,),
    # BN gamma/beta (C,).  Conv biases are intentionally ignored (training-mode BN).
    w1, _b1, g1, bt1, w2, _b2, g2, bt2 = params
    N, Cin, H, W = x_nchw.shape
    Cmid, Cout = w1.shape[0], w2.shape[0]
    Hp, Wp = H + 2, W + 2
    S = Hp * Wp
    S_pad = _round_up(S, 128)          # per-image flat padded spatial, 128-lane aligned
    L = N * S_pad
    Cin_p, Cmid_p, Cout_p = (_round_up(c, 8) for c in (Cin, Cmid, Cout))
    # im2col (K = 9*Cin_p) only while channels are tiny; otherwise accumulate 9 tap matmuls.
    im2col1, im2col2 = Cin_p < 64, Cmid_p < 64
    roll_mode = _probe_roll_mode()

    # ---- glue: NCHW -> channels-on-sublanes, per-image padded flat spatial (x batch) on lanes
    # TODO(synk): at memory-bound production sizes fold this pad/transpose (and the output
    # un-pad) into the kernel via BlockSpec index_maps / pl.ANY + manual DMA instead of
    # separate XLA materializations.
    x = jnp.pad(x_nchw.astype(jnp.float32), ((0, 0), (0, 0), (1, 1), (1, 1)))  # (N,Cin,Hp,Wp)
    x = x.reshape(N, Cin, S)
    x = jnp.pad(x, ((0, 0), (0, Cin_p - Cin), (0, S_pad - S)))                 # (N,Cin_p,S_pad)
    x = jnp.transpose(x, (1, 0, 2)).reshape(Cin_p, L).astype(jnp.bfloat16)

    def wmat(w, ci_p, co_p, use_im2col):
        co, ci = w.shape[0], w.shape[1]
        wt = jnp.transpose(w.astype(jnp.float32), (2, 3, 0, 1))                # (3,3,co,ci)
        wt = jnp.pad(wt, ((0, 0), (0, 0), (0, co_p - co), (0, ci_p - ci)))
        wt = wt.reshape(9, co_p, ci_p)                                         # tap-major
        if use_im2col:
            wt = jnp.transpose(wt, (1, 0, 2)).reshape(co_p, 9 * ci_p)          # tap-major cols
        return wt.astype(jnp.bfloat16)

    w1m = wmat(w1, Cin_p, Cmid_p, im2col1)
    w2m = wmat(w2, Cmid_p, Cout_p, im2col2)

    def cvec(v, c_p):
        v = v.reshape(-1, 1).astype(jnp.float32)
        return jnp.pad(v, ((0, c_p - v.shape[0]), (0, 0)))   # padded rows -> gamma/beta 0

    g1v, bt1v = cvec(g1, Cmid_p), cvec(bt1, Cmid_p)
    g2v, bt2v = cvec(g2, Cout_p), cvec(bt2, Cout_p)

    # Validity mask for the padded layout (interior pixels of each image); shape-only
    # constant, shipped as one tiny (1, L) input.
    rr = jnp.arange(S) // Wp
    cc = jnp.arange(S) % Wp
    mv = ((rr >= 1) & (rr <= H) & (cc >= 1) & (cc <= W)).astype(jnp.float32)
    mask = jnp.tile(jnp.pad(mv, (0, S_pad - S)), N).reshape(1, L)

    kernel = functools.partial(_two_convs_kernel, N, H, W, S_pad,
                               im2col1, im2col2, roll_mode)
    out_flat = pl.pallas_call(
        kernel,
        out_shape=jax.ShapeDtypeStruct((Cout_p, L), jnp.float32),
        in_specs=[pl.BlockSpec(memory_space=pltpu.MemorySpace.VMEM)] * 8,
        out_specs=pl.BlockSpec(memory_space=pltpu.MemorySpace.VMEM),
    )(x, mask, w1m, g1v, bt1v, w2m, g2v, bt2v)

    out = out_flat.reshape(Cout_p, N, S_pad)[:Cout, :, :S]
    out = out.reshape(Cout, N, Hp, Wp)[:, :, 1:H + 1, 1:W + 1]
    return jnp.transpose(out, (1, 0, 2, 3))               # back to NCHW


def two_convs_ref(x_nchw, params):
    # Pure-JAX reference: nn.Sequential(Conv2d(pad=1), BatchNorm2d(train), ReLU) x 2.
    w1, b1, g1, bt1, w2, b2, g2, bt2 = params

    def conv(x, w, b):
        y = jax.lax.conv_general_dilated(
            x, w, (1, 1), 'SAME',
            dimension_numbers=('NCHW', 'OIHW', 'NCHW'),
            precision=jax.lax.Precision.HIGHEST)
        return y + b.reshape(1, -1, 1, 1)

    def bn_relu(y, g, bt):
        mean = jnp.mean(y, axis=(0, 2, 3), keepdims=True)
        var = jnp.mean((y - mean) ** 2, axis=(0, 2, 3), keepdims=True)
        yn = (y - mean) * jax.lax.rsqrt(var + EPS)
        return jnp.maximum(yn * g.reshape(1, -1, 1, 1) + bt.reshape(1, -1, 1, 1), 0.0)

    h = bn_relu(conv(x_nchw.astype(jnp.float32), w1, b1), g1, bt1)
    return bn_relu(conv(h, w2, b2), g2, bt2)


if __name__ == "__main__":
    N, Cin, Cmid, Cout, H, W = 2, 4, 8, 4, 16, 16

    key = jax.random.PRNGKey(0)
    kx, kp = jax.random.split(key)
    x = jax.random.normal(kx, (N, Cin, H, W), jnp.float32)

    # deterministic synthetic parameters in PyTorch layout (shapes follow the module)
    def conv_init(k, ci, co):
        bound = 1.0 / np.sqrt(ci * 9.0)
        kw, kb = jax.random.split(k)
        w = jax.random.uniform(kw, (co, ci, 3, 3), jnp.float32, -bound, bound)
        b = jax.random.uniform(kb, (co,), jnp.float32, -bound, bound)
        return w, b

    k1, k2, k3, k4 = jax.random.split(kp, 4)
    w1, b1 = conv_init(k1, Cin, Cmid)
    w2, b2 = conv_init(k2, Cmid, Cout)
    g1 = 1.0 + 0.1 * jax.random.normal(k3, (Cmid,), jnp.float32)
    bt1 = 0.1 * jax.random.normal(jax.random.fold_in(k3, 1), (Cmid,), jnp.float32)
    g2 = 1.0 + 0.1 * jax.random.normal(k4, (Cout,), jnp.float32)
    bt2 = 0.1 * jax.random.normal(jax.random.fold_in(k4, 1), (Cout,), jnp.float32)
    params = (w1, b1, g1, bt1, w2, b2, g2, bt2)

    out = jax.block_until_ready(two_convs_pallas(x, params))
    ref = jax.block_until_ready(two_convs_ref(x, params))

    assert out.shape == (N, Cout, H, W)
    np.testing.assert_allclose(np.asarray(out), np.asarray(ref), atol=5e-2, rtol=5e-2)
    print("KERNEL_OK")
</pallas_src>

<mosaic_0001>
module attributes {stable_mosaic.version = 11 : i64} {
  func.func @k(%arg0: memref<8x128xf32, #tpu.memory_space<vmem>>, %arg1: memref<8x128xf32, #tpu.memory_space<vmem>>) attributes {dimension_semantics = [], scalar_prefetch = 0 : i64, scratch_operands = 0 : i64, tpu.core_type = #tpu.core_type<tc>} {
    %c0 = arith.constant 0 : index
    %c0_0 = arith.constant 0 : index
    %0 = vector.load %arg0[%c0, %c0_0] : memref<8x128xf32, #tpu.memory_space<vmem>>, vector<8x128xf32>
    %c1_i32 = arith.constant 1 : i32
    %1 = tpu.dynamic_rotate %0 by %c1_i32 dim 1 : vector<8x128xf32>, i32 -> vector<8x128xf32>
    %c0_1 = arith.constant 0 : index
    %c0_2 = arith.constant 0 : index
    %2 = vector.load %arg1[%c0_1, %c0_2] : memref<8x128xf32, #tpu.memory_space<vmem>>, vector<8x128xf32>
    tpu.vector_store %arg1[%c0_1, %c0_2], %1 {strides = array<i32>} : memref<8x128xf32, #tpu.memory_space<vmem>>, vector<8x128xf32>,
    return
  }
}

module attributes {stable_mosaic.version = 11 : i64} {
  func.func @_two_convs_kernel(%arg0: memref<8x768xbf16, #tpu.memory_space<vmem>>, %arg1: memref<1x768xf32, #tpu.memory_space<vmem>>, %arg2: memref<8x72xbf16, #tpu.memory_space<vmem>>, %arg3: memref<8x1xf32, #tpu.memory_space<vmem>>, %arg4: memref<8x1xf32, #tpu.memory_space<vmem>>, %arg5: memref<8x72xbf16, #tpu.memory_space<vmem>>, %arg6: memref<8x1xf32, #tpu.memory_space<vmem>>, %arg7: memref<8x1xf32, #tpu.memory_space<vmem>>, %arg8: memref<8x768xf32, #tpu.memory_space<vmem>>) attributes {dimension_semantics = [], scalar_prefetch = 0 : i64, scratch_operands = 0 : i64, tpu.core_type = #tpu.core_type<tc>} {
    %c0 = arith.constant 0 : index
    %c0_0 = arith.constant 0 : index
    %0 = vector.load %arg1[%c0, %c0_0] : memref<1x768xf32, #tpu.memory_space<vmem>>, vector<1x768xf32>
    %c0_1 = arith.constant 0 : index
    %c0_2 = arith.constant 0 : index
    %1 = vector.load %arg0[%c0_1, %c0_2] : memref<8x768xbf16, #tpu.memory_space<vmem>>, vector<8x768xbf16>
    %2 = arith.extf %1 : vector<8x768xbf16> to vector<8x768xf32>
    %3 = vector.extract_strided_slice %2 {offsets = [0, 749], sizes = [8, 19], strides = [1, 1]} : vector<8x768xf32> to vector<8x19xf32>
    %4 = vector.extract_strided_slice %2 {offsets = [0, 0], sizes = [8, 749], strides = [1, 1]} : vector<8x768xf32> to vector<8x749xf32>
    %5 = tpu.concatenate %3, %4 in 1 : vector<8x19xf32>, vector<8x749xf32> -> vector<8x768xf32>
    %6 = vector.extract_strided_slice %2 {offsets = [0, 750], sizes = [8, 18], strides = [1, 1]} : vector<8x768xf32> to vector<8x18xf32>
    %7 = vector.extract_strided_slice %2 {offsets = [0, 0], sizes = [8, 750], strides = [1, 1]} : vector<8x768xf32> to vector<8x750xf32>
    %8 = tpu.concatenate %6, %7 in 1 : vector<8x18xf32>, vector<8x750xf32> -> vector<8x768xf32>
    %9 = vector.extract_strided_slice %2 {offsets = [0, 751], sizes = [8, 17], strides = [1, 1]} : vector<8x768xf32> to vector<8x17xf32>
    %10 = vector.extract_strided_slice %2 {offsets = [0, 0], sizes = [8, 751], strides = [1, 1]} : vector<8x768xf32> to vector<8x751xf32>
    %11 = tpu.concatenate %9, %10 in 1 : vector<8x17xf32>, vector<8x751xf32> -> vector<8x768xf32>
    %12 = vector.extract_strided_slice %2 {offsets = [0, 767], sizes = [8, 1], strides = [1, 1]} : vector<8x768xf32> to vector<8x1xf32>
    %13 = vector.extract_strided_slice %2 {offsets = [0, 0], sizes = [8, 767], strides = [1, 1]} : vector<8x768xf32> to vector<8x767xf32>
    %14 = tpu.concatenate %12, %13 in 1 : vector<8x1xf32>, vector<8x767xf32> -> vector<8x768xf32>
    %15 = vector.extract_strided_slice %2 {offsets = [0, 1], sizes = [8, 767], strides = [1, 1]} : vector<8x768xf32> to vector<8x767xf32>
    %16 = vector.extract_strided_slice %2 {offsets = [0, 0], sizes = [8, 1], strides = [1, 1]} : vector<8x768xf32> to vector<8x1xf32>
    %17 = tpu.concatenate %15, %16 in 1 : vector<8x767xf32>, vector<8x1xf32> -> vector<8x768xf32>
    %18 = vector.extract_strided_slice %2 {offsets = [0, 17], sizes = [8, 751], strides = [1, 1]} : vector<8x768xf32> to vector<8x751xf32>
    %19 = vector.extract_strided_slice %2 {offsets = [0, 0], sizes = [8, 17], strides = [1, 1]} : vector<8x768xf32> to vector<8x17xf32>
    %20 = tpu.concatenate %18, %19 in 1 : vector<8x751xf32>, vector<8x17xf32> -> vector<8x768xf32>
    %21 = vector.extract_strided_slice %2 {offsets = [0, 18], sizes = [8, 750], strides = [1, 1]} : vector<8x768xf32> to vector<8x750xf32>
    %22 = vector.extract_strided_slice %2 {offsets = [0, 0], sizes = [8, 18], strides = [1, 1]} : vector<8x768xf32> to vector<8x18xf32>
    %23 = tpu.concatenate %21, %22 in 1 : vector<8x750xf32>, vector<8x18xf32> -> vector<8x768xf32>
    %24 = vector.extract_strided_slice %2 {offsets = [0, 19], sizes = [8, 749], strides = [1, 1]} : vector<8x768xf32> to vector<8x749xf32>
    %25 = vector.extract_strided_slice %2 {offsets = [0, 0], sizes = [8, 19], strides = [1, 1]} : vector<8x768xf32> to vector<8x19xf32>
    %26 = tpu.concatenate %24, %25 in 1 : vector<8x749xf32>, vector<8x19xf32> -> vector<8x768xf32>
    %27 = tpu.concatenate %5, %8, %11, %14, %2, %17, %20, %23, %26 in 0 : vector<8x768xf32>, vector<8x768xf32>, vector<8x768xf32>, vector<8x768xf32>, vector<8x768xf32>, vector<8x768xf32>, vector<8x768xf32>, vector<8x768xf32>, vector<8x768xf32> -> vector<72x768xf32>
    %c0_3 = arith.constant 0 : index
    %c0_4 = arith.constant 0 : index
    %28 = vector.load %arg2[%c0_3, %c0_4] : memref<8x72xbf16, #tpu.memory_space<vmem>>, vector<8x72xbf16>
    %29 = arith.truncf %27 : vector<72x768xf32> to vector<72x768xbf16>
    %cst = arith.constant dense<0.000000e+00> : vector<8x768xf32>
    %30 = tpu.matmul %28, %29, %cst {dimension_numbers = #tpu.dot_dimension_numbers<[1], [0], [0], [1], [0, 0, 1, 1], [], []>} : vector<8x72xbf16>, vector<72x768xbf16>, vector<8x768xf32> -> vector<8x768xf32>
    %31 = vector.shape_cast %0 : vector<1x768xf32> to vector<1x768xf32>
    %32 = vector.broadcast %31 : vector<1x768xf32> to vector<8x768xf32>
    %33 = arith.mulf %30, %32 : vector<8x768xf32>
    %cst_5 = arith.constant dense<0.000000e+00> : vector<8xf32>
    %34 = vector.multi_reduction <add>, %33, %cst_5 [1] : vector<8x768xf32> to vector<8xf32>
    %35 = vector.shape_cast %34 : vector<8xf32> to vector<8x1xf32>
    %36 = arith.mulf %33, %33 : vector<8x768xf32>
    %cst_6 = arith.constant dense<0.000000e+00> : vector<8xf32>
    %37 = vector.multi_reduction <add>, %36, %cst_6 [1] : vector<8x768xf32> to vector<8xf32>
    %38 = vector.shape_cast %37 : vector<8xf32> to vector<8x1xf32>
    %cst_7 = arith.constant 5.120000e+02 : f32
    %39 = vector.broadcast %cst_7 : f32 to vector<8x1xf32>
    %40 = arith.divf %35, %39 : vector<8x1xf32>
    %cst_8 = arith.constant 5.120000e+02 : f32
    %41 = vector.broadcast %cst_8 : f32 to vector<8x1xf32>
    %42 = arith.divf %38, %41 : vector<8x1xf32>
    %43 = arith.mulf %40, %40 : vector<8x1xf32>
    %44 = arith.subf %42, %43 : vector<8x1xf32>
    %cst_9 = arith.constant 0.000000e+00 : f32
    %45 = vector.broadcast %cst_9 : f32 to vector<8x1xf32>
    %46 = arith.maximumf %44, %45 : vector<8x1xf32>
    %47 = vector.broadcast %40 : vector<8x1xf32> to vector<8x768xf32>
    %48 = arith.subf %30, %47 : vector<8x768xf32>
    %cst_10 = arith.constant 9.99999974E-6 : f32
    %49 = vector.broadcast %cst_10 : f32 to vector<8x1xf32>
    %50 = arith.addf %46, %49 : vector<8x1xf32>
    %51 = math.rsqrt %50 : vector<8x1xf32>
    %52 = vector.broadcast %51 : vector<8x1xf32> to vector<8x768xf32>
    %53 = arith.mulf %48, %52 : vector<8x768xf32>
    %c0_11 = arith.constant 0 : index
    %c0_12 = arith.constant 0 : index
    %54 = vector.load %arg3[%c0_11, %c0_12] : memref<8x1xf32, #tpu.memory_space<vmem>>, vector<8x1xf32>
    %55 = vector.broadcast %54 : vector<8x1xf32> to vector<8x768xf32>
    %56 = arith.mulf %53, %55 : vector<8x768xf32>
    %c0_13 = arith.constant 0 : index
    %c0_14 = arith.constant 0 : index
    %57 = vector.load %arg4[%c0_13, %c0_14] : memref<8x1xf32, #tpu.memory_space<vmem>>, vector<8x1xf32>
    %58 = vector.broadcast %57 : vector<8x1xf32> to vector<8x768xf32>
    %59 = arith.addf %56, %58 : vector<8x768xf32>
    %cst_15 = arith.constant 0.000000e+00 : f32
    %60 = vector.broadcast %cst_15 : f32 to vector<8x768xf32>
    %61 = arith.maximumf %59, %60 : vector<8x768xf32>
    %62 = arith.mulf %61, %32 : vector<8x768xf32>
    %63 = vector.extract_strided_slice %62 {offsets = [0, 749], sizes = [8, 19], strides = [1, 1]} : vector<8x768xf32> to vector<8x19xf32>
    %64 = vector.extract_strided_slice %62 {offsets = [0, 0], sizes = [8, 749], strides = [1, 1]} : vector<8x768xf32> to vector<8x749xf32>
    %65 = tpu.concatenate %63, %64 in 1 : vector<8x19xf32>, vector<8x749xf32> -> vector<8x768xf32>
    %66 = vector.extract_strided_slice %62 {offsets = [0, 750], sizes = [8, 18], strides = [1, 1]} : vector<8x768xf32> to vector<8x18xf32>
    %67 = vector.extract_strided_slice %62 {offsets = [0, 0], sizes = [8, 750], strides = [1, 1]} : vector<8x768xf32> to vector<8x750xf32>
    %68 = tpu.concatenate %66, %67 in 1 : vector<8x18xf32>, vector<8x750xf32> -> vector<8x768xf32>
    %69 = vector.extract_strided_slice %62 {offsets = [0, 751], sizes = [8, 17], strides = [1, 1]} : vector<8x768xf32> to vector<8x17xf32>
    %70 = vector.extract_strided_slice %62 {offsets = [0, 0], sizes = [8, 751], strides = [1, 1]} : vector<8x768xf32> to vector<8x751xf32>
    %71 = tpu.concatenate %69, %70 in 1 : vector<8x17xf32>, vector<8x751xf32> -> vector<8x768xf32>
    %72 = vector.extract_strided_slice %62 {offsets = [0, 767], sizes = [8, 1], strides = [1, 1]} : vector<8x768xf32> to vector<8x1xf32>
    %73 = vector.extract_strided_slice %62 {offsets = [0, 0], sizes = [8, 767], strides = [1, 1]} : vector<8x768xf32> to vector<8x767xf32>
    %74 = tpu.concatenate %72, %73 in 1 : vector<8x1xf32>, vector<8x767xf32> -> vector<8x768xf32>
    %75 = vector.extract_strided_slice %62 {offsets = [0, 1], sizes = [8, 767], strides = [1, 1]} : vector<8x768xf32> to vector<8x767xf32>
    %76 = vector.extract_strided_slice %62 {offsets = [0, 0], sizes = [8, 1], strides = [1, 1]} : vector<8x768xf32> to vector<8x1xf32>
    %77 = tpu.concatenate %75, %76 in 1 : vector<8x767xf32>, vector<8x1xf32> -> vector<8x768xf32>
    %78 = vector.extract_strided_slice %62 {offsets = [0, 17], sizes = [8, 751], strides = [1, 1]} : vector<8x768xf32> to vector<8x751xf32>
    %79 = vector.extract_strided_slice %62 {offsets = [0, 0], sizes = [8, 17], strides = [1, 1]} : vector<8x768xf32> to vector<8x17xf32>
    %80 = tpu.concatenate %78, %79 in 1 : vector<8x751xf32>, vector<8x17xf32> -> vector<8x768xf32>
    %81 = vector.extract_strided_slice %62 {offsets = [0, 18], sizes = [8, 750], strides = [1, 1]} : vector<8x768xf32> to vector<8x750xf32>
    %82 = vector.extract_strided_slice %62 {offsets = [0, 0], sizes = [8, 18], strides = [1, 1]} : vector<8x768xf32> to vector<8x18xf32>
    %83 = tpu.concatenate %81, %82 in 1 : vector<8x750xf32>, vector<8x18xf32> -> vector<8x768xf32>
    %84 = vector.extract_strided_slice %62 {offsets = [0, 19], sizes = [8, 749], strides = [1, 1]} : vector<8x768xf32> to vector<8x749xf32>
    %85 = vector.extract_strided_slice %62 {offsets = [0, 0], sizes = [8, 19], strides = [1, 1]} : vector<8x768xf32> to vector<8x19xf32>
    %86 = tpu.concatenate %84, %85 in 1 : vector<8x749xf32>, vector<8x19xf32> -> vector<8x768xf32>
    %87 = tpu.concatenate %65, %68, %71, %74, %62, %77, %80, %83, %86 in 0 : vector<8x768xf32>, vector<8x768xf32>, vector<8x768xf32>, vector<8x768xf32>, vector<8x768xf32>, vector<8x768xf32>, vector<8x768xf32>, vector<8x768xf32>, vector<8x768xf32> -> vector<72x768xf32>
    %c0_16 = arith.constant 0 : index
    %c0_17 = arith.constant 0 : index
    %88 = vector.load %arg5[%c0_16, %c0_17] : memref<8x72xbf16, #tpu.memory_space<vmem>>, vector<8x72xbf16>
    %89 = arith.truncf %87 : vector<72x768xf32> to vector<72x768xbf16>
    %cst_18 = arith.constant dense<0.000000e+00> : vector<8x768xf32>
    %90 = tpu.matmul %88, %89, %cst_18 {dimension_numbers = #tpu.dot_dimension_numbers<[1], [0], [0], [1], [0, 0, 1, 1], [], []>} : vector<8x72xbf16>, vector<72x768xbf16>, vector<8x768xf32> -> vector<8x768xf32>
    %91 = vector.shape_cast %0 : vector<1x768xf32> to vector<1x768xf32>
    %92 = vector.broadcast %91 : vector<1x768xf32> to vector<8x768xf32>
    %93 = arith.mulf %90, %92 : vector<8x768xf32>
    %cst_19 = arith.constant dense<0.000000e+00> : vector<8xf32>
    %94 = vector.multi_reduction <add>, %93, %cst_19 [1] : vector<8x768xf32> to vector<8xf32>
    %95 = vector.shape_cast %94 : vector<8xf32> to vector<8x1xf32>
    %96 = arith.mulf %93, %93 : vector<8x768xf32>
    %cst_20 = arith.constant dense<0.000000e+00> : vector<8xf32>
    %97 = vector.multi_reduction <add>, %96, %cst_20 [1] : vector<8x768xf32> to vector<8xf32>
    %98 = vector.shape_cast %97 : vector<8xf32> to vector<8x1xf32>
    %cst_21 = arith.constant 5.120000e+02 : f32
    %99 = vector.broadcast %cst_21 : f32 to vector<8x1xf32>
    %100 = arith.divf %95, %99 : vector<8x1xf32>
    %cst_22 = arith.constant 5.120000e+02 : f32
    %101 = vector.broadcast %cst_22 : f32 to vector<8x1xf32>
    %102 = arith.divf %98, %101 : vector<8x1xf32>
    %103 = arith.mulf %100, %100 : vector<8x1xf32>
    %104 = arith.subf %102, %103 : vector<8x1xf32>
    %cst_23 = arith.constant 0.000000e+00 : f32
    %105 = vector.broadcast %cst_23 : f32 to vector<8x1xf32>
    %106 = arith.maximumf %104, %105 : vector<8x1xf32>
    %107 = vector.broadcast %100 : vector<8x1xf32> to vector<8x768xf32>
    %108 = arith.subf %90, %107 : vector<8x768xf32>
    %cst_24 = arith.constant 9.99999974E-6 : f32
    %109 = vector.broadcast %cst_24 : f32 to vector<8x1xf32>
    %110 = arith.addf %106, %109 : vector<8x1xf32>
    %111 = math.rsqrt %110 : vector<8x1xf32>
    %112 = vector.broadcast %111 : vector<8x1xf32> to vector<8x768xf32>
    %113 = arith.mulf %108, %112 : vector<8x768xf32>
    %c0_25 = arith.constant 0 : index
    %c0_26 = arith.constant 0 : index
    %114 = vector.load %arg6[%c0_25, %c0_26] : memref<8x1xf32, #tpu.memory_space<vmem>>, vector<8x1xf32>
    %115 = vector.broadcast %114 : vector<8x1xf32> to vector<8x768xf32>
    %116 = arith.mulf %113, %115 : vector<8x768xf32>
    %c0_27 = arith.constant 0 : index
    %c0_28 = arith.constant 0 : index
    %117 = vector.load %arg7[%c0_27, %c0_28] : memref<8x1xf32, #tpu.memory_space<vmem>>, vector<8x1xf32>
    %118 = vector.broadcast %117 : vector<8x1xf32> to vector<8x768xf32>
    %119 = arith.addf %116, %118 : vector<8x768xf32>
    %cst_29 = arith.constant 0.000000e+00 : f32
    %120 = vector.broadcast %cst_29 : f32 to vector<8x768xf32>
    %121 = arith.maximumf %119, %120 : vector<8x768xf32>
    %c0_30 = arith.constant 0 : index
    %c0_31 = arith.constant 0 : index
    %122 = vector.load %arg8[%c0_30, %c0_31] : memref<8x768xf32, #tpu.memory_space<vmem>>, vector<8x768xf32>
    tpu.vector_store %arg8[%c0_30, %c0_31], %121 {strides = array<i32>} : memref<8x768xf32, #tpu.memory_space<vmem>>, vector<8x768xf32>,
    return
  }
}

</mosaic_0001>

<llo_original>
// kernel: tpu_custom_call.1
$region0: #{tpu_custom_call.1}
  #allocation0 [shape = 'u32[]', space=smem, size = 0x4, offset = 0x4, fixed_abs, tag = 'smem constant byte address 0x4 - core index']
  #allocation1 [shape = 'u32[144,128]{1,0:T(1,128)}', space=vmem, size = 0x12000, scoped, tag = 'internal scratch']
  %s0 = inlined_call_operand.hbm [shape: f32[8,128], index: 0, kind: input, shape index: {}]
  %s1 = inlined_call_operand.hbm [shape: f32[8,128], index: 1, kind: output, shape index: {}]
  %s2 = sld [smem:[#allocation0]]
  $region18: #{tpu_custom_call.1} parent=0
    _
  %s4 = ssub.s32 1, %s2
  %s5 = scalar_select 0, %s4, %s2
  $region1: #{tpu_custom_call.1} parent=0
    #allocation2 [shape = 'u8[4096]{0}', space=vmem, size = 0x1000, scoped, tag = 'input window, operand 0, single buffered']
    #allocation3 [shape = 's32[1]{0}', space=sflag, size = 0x4, scoped, tag = 'scoped memory for tpu_custom_call.1']
    #allocation4 [shape = 's32[1]{0}', space=sflag, size = 0x4, scoped, tag = 'scoped memory for tpu_custom_call.1']
    #allocation5 [shape = 'u8[4096]{0}', space=vmem, size = 0x1000, scoped, tag = 'output window, operand 0, single buffered']
    %6 = vsyncpa [#allocation3], 0
    %7 = vsyncpa [#allocation4], 0
    // Predicated region
    $region2: #{tpu_custom_call.1} parent=1 // pred_check
      _
    $region3: #{tpu_custom_call.1} parent=1 // pred_check_branch
      %9 = sbr.rel (0) target = $region5
    $region4: #{tpu_custom_call.1} parent=1 // pred_region
      %s11 = ssub.s32 128, 128
      %12 = vsyncadd [#allocation3], %s11
      %s14 = sshll.u32 [#allocation2], 4
      %s15 = int_to_ptr.vmem [resolvable:$true] %s14
      %17 = dma.hbm_to_vmem [thread:$0]  %s0, 128, %s15, [#allocation3]
    $region5: #{tpu_custom_call.1} parent=1 // pred_fallthru
      _
    // Predicated region
    $region6: #{tpu_custom_call.1} parent=1 // pred_check
      _
    $region7: #{tpu_custom_call.1} parent=1 // pred_check_branch
      %19 = sbr.rel (0) target = $region9
    $region8: #{tpu_custom_call.1} parent=1 // pred_region
      %20 = dma.done [#allocation3], 128
    $region9: #{tpu_custom_call.1} parent=1 // pred_fallthru
      _
    %v21 = vld [vmem:[#allocation2] sm:$0xff]
    %22 = vrot.lane.b32.xlu0 %v21, 1
    %v23 = vpop.permute.xlu0 %22
    %24 = vst [vmem:[#allocation5] sm:$0xff] %v23
    // Predicated region
    $region10: #{tpu_custom_call.1} parent=1 // pred_check
      _
    $region11: #{tpu_custom_call.1} parent=1 // pred_check_branch
      %26 = sbr.rel (0) target = $region13
    $region12: #{tpu_custom_call.1} parent=1 // pred_region
      %s28 = ssub.s32 128, 128
      %29 = vsyncadd [#allocation4], %s28
      %s31 = sshll.u32 [#allocation5], 4
      %s32 = int_to_ptr.vmem [resolvable:$true] %s31
      %34 = dma.vmem_to_hbm [thread:$0]  %s32, 128, %s1, [#allocation4]
    $region13: #{tpu_custom_call.1} parent=1 // pred_fallthru
      _
    // Predicated region
    $region14: #{tpu_custom_call.1} parent=1 // pred_check
      _
    $region15: #{tpu_custom_call.1} parent=1 // pred_check_branch
      %36 = sbr.rel (0) target = $region17
    $region16: #{tpu_custom_call.1} parent=1 // pred_region
      %37 = dma.done [#allocation4], 128
    $region17: #{tpu_custom_call.1} parent=1 // pred_fallthru
      _
    %38 = vsyncpa [#allocation3], 1
    %39 = vsyncpa [#allocation4], 1

// kernel: tpu_custom_call.1
$region0: #{tpu_custom_call.1}
  #allocation0 [shape = 'u32[]', space=smem, size = 0x4, offset = 0x4, fixed_abs, tag = 'smem constant byte address 0x4 - core index']
  #allocation1 [shape = 'u32[144,128]{1,0:T(1,128)}', space=vmem, size = 0x12000, scoped, tag = 'internal scratch']
  %s0 = inlined_call_operand.vmem [shape: bf16[8,768], index: 0, kind: input, shape index: {}]
  %s1 = inlined_call_operand.vmem [shape: f32[1,768], index: 1, kind: input, shape index: {}]
  %s2 = inlined_call_operand.vmem [shape: bf16[8,72], index: 2, kind: input, shape index: {}]
  %s3 = inlined_call_operand.vmem [shape: f32[8,1], index: 3, kind: input, shape index: {}]
  %s4 = inlined_call_operand.vmem [shape: f32[8,1], index: 4, kind: input, shape index: {}]
  %s5 = inlined_call_operand.vmem [shape: bf16[8,72], index: 5, kind: input, shape index: {}]
  %s6 = inlined_call_operand.vmem [shape: f32[8,1], index: 6, kind: input, shape index: {}]
  %s7 = inlined_call_operand.vmem [shape: f32[8,1], index: 7, kind: input, shape index: {}]
  %s8 = inlined_call_operand.hbm [shape: f32[8,768], index: 8, kind: output, shape index: {}]
  %s9 = sld [smem:[#allocation0]]
  $region42: #{tpu_custom_call.1} parent=0
    _
  %s11 = ssub.s32 1, %s9
  %s12 = scalar_select 0, %s11, %s9
  $region1: #{tpu_custom_call.1} parent=0
    #allocation2 [shape = 'u8[24576]{0}', space=vmem, size = 0x6000, scoped, tag = 'output window, operand 0, single buffered']
    #allocation3 [shape = 's32[1]{0}', space=sflag, size = 0x4, scoped, tag = 'scoped memory for tpu_custom_call.1']
    %13 = vsyncpa [#allocation3], 0
    // Predicated region
    $region2: #{tpu_custom_call.1} parent=1 // pred_check
      _
    $region3: #{tpu_custom_call.1} parent=1 // pred_check_branch
      %15 = sbr.rel (0) target = $region5
    $region4: #{tpu_custom_call.1} parent=1 // pred_region
      _
    $region5: #{tpu_custom_call.1} parent=1 // pred_fallthru
      _
    // Predicated region
    $region6: #{tpu_custom_call.1} parent=1 // pred_check
      _
    $region7: #{tpu_custom_call.1} parent=1 // pred_check_branch
      %17 = sbr.rel (0) target = $region9
    $region8: #{tpu_custom_call.1} parent=1 // pred_region
      _
    $region9: #{tpu_custom_call.1} parent=1 // pred_fallthru
      _
    // Predicated region
    $region10: #{tpu_custom_call.1} parent=1 // pred_check
      _
    $region11: #{tpu_custom_call.1} parent=1 // pred_check_branch
      %19 = sbr.rel (0) target = $region13
    $region12: #{tpu_custom_call.1} parent=1 // pred_region
      _
    $region13: #{tpu_custom_call.1} parent=1 // pred_fallthru
      _
    // Predicated region
    $region14: #{tpu_custom_call.1} parent=1 // pred_check
      _
    $region15: #{tpu_custom_call.1} parent=1 // pred_check_branch
      %21 = sbr.rel (0) target = $region17
    $region16: #{tpu_custom_call.1} parent=1 // pred_region
      _
    $region17: #{tpu_custom_call.1} parent=1 // pred_fallthru
      _
    // Predicated region
    $region18: #{tpu_custom_call.1} parent=1 // pred_check
      _
    $region19: #{tpu_custom_call.1} parent=1 // pred_check_branch
      %23 = sbr.rel (0) target = $region21
    $region20: #{tpu_custom_call.1} parent=1 // pred_region
      _
    $region21: #{tpu_custom_call.1} parent=1 // pred_fallthru
      _
    // Predicated region
    $region22: #{tpu_custom_call.1} parent=1 // pred_check
      _
    $region23: #{tpu_custom_call.1} parent=1 // pred_check_branch
      %25 = sbr.rel (0) target = $region25
    $region24: #{tpu_custom_call.1} parent=1 // pred_region
      _
    $region25: #{tpu_custom_call.1} parent=1 // pred_fallthru
      _
    // Predicated region
    $region26: #{tpu_custom_call.1} parent=1 // pred_check
      _
    $region27: #{tpu_custom_call.1} parent=1 // pred_check_branch
      %27 = sbr.rel (0) target = $region29
    $region28: #{tpu_custom_call.1} parent=1 // pred_region
      _
    $region29: #{tpu_custom_call.1} parent=1 // pred_fallthru
      _
    // Predicated region
    $region30: #{tpu_custom_call.1} parent=1 // pred_check
      _
    $region31: #{tpu_custom_call.1} parent=1 // pred_check_branch
      %29 = sbr.rel (0) target = $region33
    $region32: #{tpu_custom_call.1} parent=1 // pred_region
      _
    $region33: #{tpu_custom_call.1} parent=1 // pred_fallthru
      _
    %v31 = vld [vmem:[%s1] sm:$0x3f]
    %v32 = vld [vmem:[%s0] sm:$0xff]
    %v33 = vld [vmem:[%s0 + $0x8] sm:$0xff]
    %v34 = vld [vmem:[%s0 + $0x10] sm:$0xff]
    %v35 = vunpack.c.l.bf16 %v32
    %v36 = vunpack.c.h.bf16 %v32
    %v37 = vunpack.c.l.bf16 %v33
    %v38 = vunpack.c.h.bf16 %v33
    %v39 = vunpack.c.l.bf16 %v34
    %v40 = vunpack.c.h.bf16 %v34
    %42 = vrot.lane.b32.xlu0 %v40, 19
    %v43 = vpop.permute.xlu0 %42
    %50 = vrot.lane.b32.xlu0 %v35, 19
    %v51 = vpop.permute.xlu0 %50
    %52 = vrot.lane.b32.xlu0 %v36, 19
    %v53 = vpop.permute.xlu0 %52
    %54 = vrot.lane.b32.xlu0 %v37, 19
    %v55 = vpop.permute.xlu0 %54
    %56 = vrot.lane.b32.xlu0 %v38, 19
    %v57 = vpop.permute.xlu0 %56
    %58 = vrot.lane.b32.xlu0 %v39, 19
    %v59 = vpop.permute.xlu0 %58
    %vm60 = vcmask 154624
    %v61 = vsel %vm60, %v51, %v53
    %v62 = vsel %vm60, %v53, %v55
    %v63 = vsel %vm60, %v55, %v57
    %v64 = vsel %vm60, %v57, %v59
    %v65 = vsel %vm60, %v59, %v43
    %v72 = vsel %vm60, %v43, %v51
    %73 = vrot.lane.b32.xlu0 %v40, 18
    %v74 = vpop.permute.xlu0 %73
    %76 = vrot.lane.b32.xlu0 %v35, 18
    %v77 = vpop.permute.xlu0 %76
    %78 = vrot.lane.b32.xlu0 %v36, 18
    %v79 = vpop.permute.xlu0 %78
    %80 = vrot.lane.b32.xlu0 %v37, 18
    %v81 = vpop.permute.xlu0 %80
    %82 = vrot.lane.b32.xlu0 %v38, 18
    %v83 = vpop.permute.xlu0 %82
    %84 = vrot.lane.b32.xlu0 %v39, 18
    %v85 = vpop.permute.xlu0 %84
    %vm86 = vcmask 146432
    %v87 = vsel %vm86, %v77, %v79
    %v88 = vsel %vm86, %v79, %v81
    %v89 = vsel %vm86, %v81, %v83
    %v90 = vsel %vm86, %v83, %v85
    %v91 = vsel %vm86, %v85, %v74
    %v98 = vsel %vm86, %v74, %v77
    %99 = vrot.lane.b32.xlu0 %v40, 17
    %v100 = vpop.permute.xlu0 %99
    %102 = vrot.lane.b32.xlu0 %v35, 17
    %v103 = vpop.permute.xlu0 %102
    %104 = vrot.lane.b32.xlu0 %v36, 17
    %v105 = vpop.permute.xlu0 %104
    %106 = vrot.lane.b32.xlu0 %v37, 17
    %v107 = vpop.permute.xlu0 %106
    %108 = vrot.lane.b32.xlu0 %v38, 17
    %v109 = vpop.permute.xlu0 %108
    %110 = vrot.lane.b32.xlu0 %v39, 17
    %v111 = vpop.permute.xlu0 %110
    %vm112 = vcmask 138240
    %v113 = vsel %vm112, %v103, %v105
    %v114 = vsel %vm112, %v105, %v107
    %v115 = vsel %vm112, %v107, %v109
    %v116 = vsel %vm112, %v109, %v111
    %v117 = vsel %vm112, %v111, %v100
    %v124 = vsel %vm112, %v100, %v103
    %125 = vrot.lane.b32.xlu0 %v40, 1
    %v126 = vpop.permute.xlu0 %125
    %128 = vrot.lane.b32.xlu0 %v35, 1
    %v129 = vpop.permute.xlu0 %128
    %130 = vrot.lane.b32.xlu0 %v36, 1
    %v131 = vpop.permute.xlu0 %130
    %132 = vrot.lane.b32.xlu0 %v37, 1
    %v133 = vpop.permute.xlu0 %132
    %134 = vrot.lane.b32.xlu0 %v38, 1
    %v135 = vpop.permute.xlu0 %134
    %136 = vrot.lane.b32.xlu0 %v39, 1
    %v137 = vpop.permute.xlu0 %136
    %vm138 = vcmask 7168
    %v139 = vsel %vm138, %v129, %v131
    %v140 = vsel %vm138, %v131, %v133
    %v141 = vsel %vm138, %v133, %v135
    %v142 = vsel %vm138, %v135, %v137
    %v143 = vsel %vm138, %v137, %v126
    %v150 = vsel %vm138, %v126, %v129
    %151 = vrot.lane.b32.xlu0 %v35, 127
    %v152 = vpop.permute.xlu0 %151
    %153 = vrot.lane.b32.xlu0 %v36, 127
    %v154 = vpop.permute.xlu0 %153
    %155 = vrot.lane.b32.xlu0 %v37, 127
    %v156 = vpop.permute.xlu0 %155
    %157 = vrot.lane.b32.xlu0 %v38, 127
    %v158 = vpop.permute.xlu0 %157
    %159 = vrot.lane.b32.xlu0 %v39, 127
    %v160 = vpop.permute.xlu0 %159
    %161 = vrot.lane.b32.xlu0 %v40, 127
    %v162 = vpop.permute.xlu0 %161
    %vm163 = vcmask 1039360
    %v164 = vsel %vm163, %v152, %v154
    %v165 = vsel %vm163, %v154, %v156
    %v166 = vsel %vm163, %v156, %v158
    %v167 = vsel %vm163, %v158, %v160
    %v168 = vsel %vm163, %v160, %v162
    %v176 = vsel %vm163, %v162, %v152
    %177 = vrot.lane.b32.xlu0 %v35, 111
    %v178 = vpop.permute.xlu0 %177
    %179 = vrot.lane.b32.xlu0 %v36, 111
    %v180 = vpop.permute.xlu0 %179
    %181 = vrot.lane.b32.xlu0 %v37, 111
    %v182 = vpop.permute.xlu0 %181
    %183 = vrot.lane.b32.xlu0 %v38, 111
    %v184 = vpop.permute.xlu0 %183
    %185 = vrot.lane.b32.xlu0 %v39, 111
    %v186 = vpop.permute.xlu0 %185
    %187 = vrot.lane.b32.xlu0 %v40, 111
    %v188 = vpop.permute.xlu0 %187
    %vm189 = vcmask 908288
    %v190 = vsel %vm189, %v178, %v180
    %v191 = vsel %vm189, %v180, %v182
    %v192 = vsel %vm189, %v182, %v184
    %v193 = vsel %vm189, %v184, %v186
    %v194 = vsel %vm189, %v186, %v188
    %v202 = vsel %vm189, %v188, %v178
    %203 = vrot.lane.b32.xlu0 %v35, 110
    %v204 = vpop.permute.xlu0 %203
    %205 = vrot.lane.b32.xlu0 %v36, 110
    %v206 = vpop.permute.xlu0 %205
    %207 = vrot.lane.b32.xlu0 %v37, 110
    %v208 = vpop.permute.xlu0 %207
    %209 = vrot.lane.b32.xlu0 %v38, 110
    %v210 = vpop.permute.xlu0 %209
    %211 = vrot.lane.b32.xlu0 %v39, 110
    %v212 = vpop.permute.xlu0 %211
    %213 = vrot.lane.b32.xlu0 %v40, 110
    %v214 = vpop.permute.xlu0 %213
    %vm215 = vcmask 900096
    %v216 = vsel %vm215, %v204, %v206
    %v217 = vsel %vm215, %v206, %v208
    %v218 = vsel %vm215, %v208, %v210
    %v219 = vsel %vm215, %v210, %v212
    %v220 = vsel %vm215, %v212, %v214
    %v228 = vsel %vm215, %v214, %v204
    %229 = vrot.lane.b32.xlu0 %v35, 109
    %v230 = vpop.permute.xlu0 %229
    %231 = vrot.lane.b32.xlu0 %v36, 109
    %v232 = vpop.permute.xlu0 %231
    %233 = vrot.lane.b32.xlu0 %v37, 109
    %v234 = vpop.permute.xlu0 %233
    %235 = vrot.lane.b32.xlu0 %v38, 109
    %v236 = vpop.permute.xlu0 %235
    %237 = vrot.lane.b32.xlu0 %v39, 109
    %v238 = vpop.permute.xlu0 %237
    %239 = vrot.lane.b32.xlu0 %v40, 109
    %v240 = vpop.permute.xlu0 %239
    %vm241 = vcmask 891904
    %v242 = vsel %vm241, %v230, %v232
    %v243 = vsel %vm241, %v232, %v234
    %v244 = vsel %vm241, %v234, %v236
    %v245 = vsel %vm241, %v236, %v238
    %v246 = vsel %vm241, %v238, %v240
    %v254 = vsel %vm241, %v240, %v230
    %v255 = vld [vmem:[%s2] sm:$0xf]
    %v256 = vpack.c.bf16 %v98, %v72
    %v257 = vpack.c.bf16 %v87, %v61
    %v258 = vpack.c.bf16 %v88, %v62
    %v259 = vpack.c.bf16 %v89, %v63
    %v260 = vpack.c.bf16 %v90, %v64
    %v261 = vpack.c.bf16 %v91, %v65
    %v262 = vpack.c.bf16 %v150, %v124
    %v263 = vpack.c.bf16 %v139, %v113
    %v264 = vpack.c.bf16 %v140, %v114
    %v265 = vpack.c.bf16 %v141, %v115
    %v266 = vpack.c.bf16 %v142, %v116
    %v267 = vpack.c.bf16 %v143, %v117
    %v268 = vpack.c.bf16 %v164, %v35
    %v269 = vpack.c.bf16 %v165, %v36
    %v270 = vpack.c.bf16 %v166, %v37
    %v271 = vpack.c.bf16 %v167, %v38
    %v272 = vpack.c.bf16 %v168, %v39
    %v273 = vpack.c.bf16 %v176, %v40
    %v274 = vpack.c.bf16 %v216, %v190
    %v275 = vpack.c.bf16 %v217, %v191
    %v276 = vpack.c.bf16 %v218, %v192
    %v277 = vpack.c.bf16 %v219, %v193
    %v278 = vpack.c.bf16 %v220, %v194
    %v279 = vpack.c.bf16 %v228, %v202
    %v280 = vpack.c.bf16 %v242, %v242
    %v281 = vpack.c.bf16 %v243, %v243
    %v282 = vpack.c.bf16 %v244, %v244
    %v283 = vpack.c.bf16 %v245, %v245
    %v284 = vpack.c.bf16 %v246, %v246
    %v285 = vpack.c.bf16 %v254, %v254
    %vm286 = vcmask 588800
    %v288 = vsel %vm286, %v255, 0
    %vm290 = vcmask 1043456
    %v292 = vsel %vm290, %v280, 0
    %v295 = vsel %vm290, %v281, 0
    %v298 = vsel %vm290, %v282, 0
    %v301 = vsel %vm290, %v283, 0
    %v304 = vsel %vm290, %v284, 0
    %v307 = vsel %vm290, %v285, 0
    %309 = vmatprep.subr.bf16.mxu0 0
    %310 = vmatpush1.bf16.msra.mxu0 0
    %311 = vmatprep.subr.bf16.mxu0 0
    %312 = vmatpush1.bf16.msra.mxu0 0
    %313 = vmatprep.subr.bf16.mxu0 0
    %314 = vmatpush1.bf16.msra.mxu0 0
    %315 = vmatprep.subr.bf16.mxu0 %v295
    %316 = vmatpush1.bf16.msra.mxu0 %v292
    %317 = vmatprep.subr.bf16.mxu0 %v275
    %318 = vmatpush1.bf16.msra.mxu0 %v274
    %319 = vmatprep.subr.bf16.mxu0 %v269
    %320 = vmatpush1.bf16.msra.mxu0 %v268
    %321 = vmatprep.subr.bf16.mxu0 %v263
    %322 = vmatpush1.bf16.msra.mxu0 %v262
    %323 = vmatprep.subr.bf16.mxu0 %v257
    %324 = vmatpush1.bf16.msra.mxu0 %v256
    %325 = vmatprep.subr.bf16.mxu0 0
    %326 = vmatpush2.bf16.msra.mxu0 0
    %327 = vmatprep.subr.bf16.mxu0 0
    %328 = vmatpush2.bf16.msra.mxu0 0
    %329 = vmatprep.subr.bf16.mxu0 0
    %330 = vmatpush2.bf16.msra.mxu0 0
    %331 = vmatprep.subr.bf16.mxu0 0
    %332 = vmatpush2.bf16.msra.mxu0 0
    %333 = vmatprep.subr.bf16.mxu0 0
    %334 = vmatpush2.bf16.msra.mxu0 0
    %335 = vmatprep.subr.bf16.mxu0 0
    %336 = vmatpush2.bf16.msra.mxu0 0
    %337 = vmatprep.subr.bf16.mxu0 0
    %338 = vmatpush2.bf16.msra.mxu0 0
    %339 = vmatprep.subr.bf16.mxu0 0
    %340 = vmatpush2.bf16.msra.mxu0 0
    %341 = vmatprep.mubr.bf16.mxu0 0
    %342 = vmatmul.mubr.bf16.gmra.mxu0 %v288
    %v343 = vpop.f32.mrf.mxu0
    %v344 = vadd.f32 0.0, %v343
    %v345 = vpop.f32.mrf.mxu0
    %v346 = vadd.f32 0.0, %v345
    %v347 = vpop.f32.mrf.mxu0
    %v348 = vpop.f32.mrf.mxu0
    %349 = vdwg.mxu0
    %350 = vmatprep.subr.bf16.mxu0 0
    %351 = vmatpush1.bf16.msra.mxu0 0
    %352 = vmatprep.subr.bf16.mxu0 0
    %353 = vmatpush1.bf16.msra.mxu0 0
    %354 = vmatprep.subr.bf16.mxu0 0
    %355 = vmatpush1.bf16.msra.mxu0 0
    %356 = vmatprep.subr.bf16.mxu0 %v301
    %357 = vmatpush1.bf16.msra.mxu0 %v298
    %358 = vmatprep.subr.bf16.mxu0 %v277
    %359 = vmatpush1.bf16.msra.mxu0 %v276
    %360 = vmatprep.subr.bf16.mxu0 %v271
    %361 = vmatpush1.bf16.msra.mxu0 %v270
    %362 = vmatprep.subr.bf16.mxu0 %v265
    %363 = vmatpush1.bf16.msra.mxu0 %v264
    %364 = vmatprep.subr.bf16.mxu0 %v259
    %365 = vmatpush1.bf16.msra.mxu0 %v258
    %366 = vmatprep.subr.bf16.mxu0 0
    %367 = vmatpush2.bf16.msra.mxu0 0
    %368 = vmatprep.subr.bf16.mxu0 0
    %369 = vmatpush2.bf16.msra.mxu0 0
    %370 = vmatprep.subr.bf16.mxu0 0
    %371 = vmatpush2.bf16.msra.mxu0 0
    %372 = vmatprep.subr.bf16.mxu0 0
    %373 = vmatpush2.bf16.msra.mxu0 0
    %374 = vmatprep.subr.bf16.mxu0 0
    %375 = vmatpush2.bf16.msra.mxu0 0
    %376 = vmatprep.subr.bf16.mxu0 0
    %377 = vmatpush2.bf16.msra.mxu0 0
    %378 = vmatprep.subr.bf16.mxu0 0
    %379 = vmatpush2.bf16.msra.mxu0 0
    %380 = vmatprep.subr.bf16.mxu0 0
    %381 = vmatpush2.bf16.msra.mxu0 0
    %382 = vmatprep.mubr.bf16.mxu0 0
    %383 = vmatmul.mubr.bf16.gmra.mxu0 %v288
    %v384 = vpop.f32.mrf.mxu0
    %v385 = vadd.f32 0.0, %v384
    %v386 = vpop.f32.mrf.mxu0
    %v387 = vadd.f32 0.0, %v386
    %v388 = vpop.f32.mrf.mxu0
    %v389 = vpop.f32.mrf.mxu0
    %390 = vdwg.mxu0
    %391 = vmatprep.subr.bf16.mxu0 0
    %392 = vmatpush1.bf16.msra.mxu0 0
    %393 = vmatprep.subr.bf16.mxu0 0
    %394 = vmatpush1.bf16.msra.mxu0 0
    %395 = vmatprep.subr.bf16.mxu0 0
    %396 = vmatpush1.bf16.msra.mxu0 0
    %397 = vmatprep.subr.bf16.mxu0 %v307
    %398 = vmatpush1.bf16.msra.mxu0 %v304
    %399 = vmatprep.subr.bf16.mxu0 %v279
    %400 = vmatpush1.bf16.msra.mxu0 %v278
    %401 = vmatprep.subr.bf16.mxu0 %v273
    %402 = vmatpush1.bf16.msra.mxu0 %v272
    %403 = vmatprep.subr.bf16.mxu0 %v267
    %404 = vmatpush1.bf16.msra.mxu0 %v266
    %405 = vmatprep.subr.bf16.mxu0 %v261
    %406 = vmatpush1.bf16.msra.mxu0 %v260
    %407 = vmatprep.subr.bf16.mxu0 0
    %408 = vmatpush2.bf16.msra.mxu0 0
    %409 = vmatprep.subr.bf16.mxu0 0
    %410 = vmatpush2.bf16.msra.mxu0 0
    %411 = vmatprep.subr.bf16.mxu0 0
    %412 = vmatpush2.bf16.msra.mxu0 0
    %413 = vmatprep.subr.bf16.mxu0 0
    %414 = vmatpush2.bf16.msra.mxu0 0
    %415 = vmatprep.subr.bf16.mxu0 0
    %416 = vmatpush2.bf16.msra.mxu0 0
    %417 = vmatprep.subr.bf16.mxu0 0
    %418 = vmatpush2.bf16.msra.mxu0 0
    %419 = vmatprep.subr.bf16.mxu0 0
    %420 = vmatpush2.bf16.msra.mxu0 0
    %421 = vmatprep.subr.bf16.mxu0 0
    %422 = vmatpush2.bf16.msra.mxu0 0
    %423 = vmatprep.mubr.bf16.mxu0 0
    %424 = vmatmul.mubr.bf16.gmra.mxu0 %v288
    %v425 = vpop.f32.mrf.mxu0
    %v426 = vadd.f32 0.0, %v425
    %v427 = vpop.f32.mrf.mxu0
    %v428 = vadd.f32 0.0, %v427
    %v429 = vpop.f32.mrf.mxu0
    %v430 = vpop.f32.mrf.mxu0
    %431 = vdwg.mxu0
    %v433 = vlaneseq
    %v434 = vshrl.u32 %v433, 7
    %v435 = vsub.s32 0, %v434
    %v436 = vrot.slane %v31, %v435
    %v437 = vlaneseq
    %v438 = vshrl.u32 %v437, 7
    %v439 = vsub.s32 1, %v438
    %v440 = vrot.slane %v31, %v439
    %v441 = vlaneseq
    %v442 = vshrl.u32 %v441, 7
    %v443 = vsub.s32 2, %v442
    %v444 = vrot.slane %v31, %v443
    %v445 = vlaneseq
    %v446 = vshrl.u32 %v445, 7
    %v447 = vsub.s32 3, %v446
    %v448 = vrot.slane %v31, %v447
    %v449 = vlaneseq
    %v450 = vshrl.u32 %v449, 7
    %v451 = vsub.s32 4, %v450
    %v452 = vrot.slane %v31, %v451
    %v453 = vlaneseq
    %v454 = vshrl.u32 %v453, 7
    %v455 = vsub.s32 5, %v454
    %v456 = vrot.slane %v31, %v455
    %v463 = vmul.f32 %v344, %v436
    %v464 = vmul.f32 %v346, %v440
    %v465 = vmul.f32 %v385, %v444
    %v466 = vmul.f32 %v387, %v448
    %v467 = vmul.f32 %v426, %v452
    %v468 = vmul.f32 %v428, %v456
    %v469 = vadd.f32 %v463, %v464
    %v470 = vadd.f32 %v469, %v465
    %v471 = vadd.f32 %v470, %v466
    %v472 = vadd.f32 %v471, %v467
    %v473 = vadd.f32 %v472, %v468
    %474 = vadd.xlane.f32.xlu0 %v473
    %v475 = vpop.xlane.xlu0 %474
    %v476 = vmul.f32 %v463, %v463
    %v477 = vmul.f32 %v464, %v464
    %v478 = vmul.f32 %v465, %v465
    %v479 = vmul.f32 %v466, %v466
    %v480 = vmul.f32 %v467, %v467
    %v481 = vmul.f32 %v468, %v468
    %v482 = vadd.f32 %v476, %v477
    %v483 = vadd.f32 %v482, %v478
    %v484 = vadd.f32 %v483, %v479
    %v485 = vadd.f32 %v484, %v480
    %v486 = vadd.f32 %v485, %v481
    %487 = vadd.xlane.f32.xlu0 %v486
    %v488 = vpop.xlane.xlu0 %487
    %v489 = vrcp.pop 512.0
    %v490 = vmul.f32 %v475, %v489
    %v491 = vmul.f32 %v488, %v489
    %v492 = vmul.f32 %v490, %v490
    %v493 = vsub.f32 %v491, %v492
    %v494 = vmax.f32 %v493, 0.0
    %v495 = vsub.f32 %v344, %v490
    %v496 = vsub.f32 %v346, %v490
    %v497 = vsub.f32 %v385, %v490
    %v498 = vsub.f32 %v387, %v490
    %v499 = vsub.f32 %v426, %v490
    %v500 = vsub.f32 %v428, %v490
    %v501 = vadd.f32 %v494, 1e-05
    %v502 = vrsqrt.pop %v501
    %v503 = vmul.f32 %v495, %v502
    %v504 = vmul.f32 %v496, %v502
    %v505 = vmul.f32 %v497, %v502
    %v506 = vmul.f32 %v498, %v502
    %v507 = vmul.f32 %v499, %v502
    %v508 = vmul.f32 %v500, %v502
    %v509 = vld [vmem:[%s3] sm:$0xff]
    %511 = vset.pattern.permute.xlu0 0
    %512 = vperm.xlu0 %511, %v509
    %v513 = vpop.permute.xlu0 %512
    %v515 = vmul.f32 %v503, %v513
    %v516 = vmul.f32 %v504, %v513
    %v517 = vmul.f32 %v505, %v513
    %v518 = vmul.f32 %v506, %v513
    %v519 = vmul.f32 %v507, %v513
    %v520 = vmul.f32 %v508, %v513
    %v521 = vld [vmem:[%s4] sm:$0xff]
    %523 = vset.pattern.permute.xlu0 0
    %524 = vperm.xlu0 %523, %v521
    %v525 = vpop.permute.xlu0 %524
    %v527 = vadd.f32 %v515, %v525
    %v528 = vadd.f32 %v516, %v525
    %v529 = vadd.f32 %v517, %v525
    %v530 = vadd.f32 %v518, %v525
    %v531 = vadd.f32 %v519, %v525
    %v532 = vadd.f32 %v520, %v525
    %v533 = vmax.f32 %v527, 0.0
    %v534 = vmax.f32 %v528, 0.0
    %v535 = vmax.f32 %v529, 0.0
    %v536 = vmax.f32 %v530, 0.0
    %v537 = vmax.f32 %v531, 0.0
    %v538 = vmax.f32 %v532, 0.0
    %v539 = vmul.f32 %v533, %v436
    %v540 = vmul.f32 %v534, %v440
    %v541 = vmul.f32 %v535, %v444
    %v542 = vmul.f32 %v536, %v448
    %v543 = vmul.f32 %v537, %v452
    %v544 = vmul.f32 %v538, %v456
    %546 = vrot.lane.b32.xlu0 %v544, 19
    %v547 = vpop.permute.xlu0 %546
    %554 = vrot.lane.b32.xlu0 %v539, 19
    %v555 = vpop.permute.xlu0 %554
    %556 = vrot.lane.b32.xlu0 %v540, 19
    %v557 = vpop.permute.xlu0 %556
    %558 = vrot.lane.b32.xlu0 %v541, 19
    %v559 = vpop.permute.xlu0 %558
    %560 = vrot.lane.b32.xlu0 %v542, 19
    %v561 = vpop.permute.xlu0 %560
    %562 = vrot.lane.b32.xlu0 %v543, 19
    %v563 = vpop.permute.xlu0 %562
    %v564 = vsel %vm60, %v555, %v557
    %v565 = vsel %vm60, %v557, %v559
    %v566 = vsel %vm60, %v559, %v561
    %v567 = vsel %vm60, %v561, %v563
    %v568 = vsel %vm60, %v563, %v547
    %v575 = vsel %vm60, %v547, %v555
    %576 = vrot.lane.b32.xlu0 %v544, 18
    %v577 = vpop.permute.xlu0 %576
    %579 = vrot.lane.b32.xlu0 %v539, 18
    %v580 = vpop.permute.xlu0 %579
    %581 = vrot.lane.b32.xlu0 %v540, 18
    %v582 = vpop.permute.xlu0 %581
    %583 = vrot.lane.b32.xlu0 %v541, 18
    %v584 = vpop.permute.xlu0 %583
    %585 = vrot.lane.b32.xlu0 %v542, 18
    %v586 = vpop.permute.xlu0 %585
    %587 = vrot.lane.b32.xlu0 %v543, 18
    %v588 = vpop.permute.xlu0 %587
    %v589 = vsel %vm86, %v580, %v582
    %v590 = vsel %vm86, %v582, %v584
    %v591 = vsel %vm86, %v584, %v586
    %v592 = vsel %vm86, %v586, %v588
    %v593 = vsel %vm86, %v588, %v577
    %v600 = vsel %vm86, %v577, %v580
    %601 = vrot.lane.b32.xlu0 %v544, 17
    %v602 = vpop.permute.xlu0 %601
    %604 = vrot.lane.b32.xlu0 %v539, 17
    %v605 = vpop.permute.xlu0 %604
    %606 = vrot.lane.b32.xlu0 %v540, 17
    %v607 = vpop.permute.xlu0 %606
    %608 = vrot.lane.b32.xlu0 %v541, 17
    %v609 = vpop.permute.xlu0 %608
    %610 = vrot.lane.b32.xlu0 %v542, 17
    %v611 = vpop.permute.xlu0 %610
    %612 = vrot.lane.b32.xlu0 %v543, 17
    %v613 = vpop.permute.xlu0 %612
    %v614 = vsel %vm112, %v605, %v607
    %v615 = vsel %vm112, %v607, %v609
    %v616 = vsel %vm112, %v609, %v611
    %v617 = vsel %vm112, %v611, %v613
    %v618 = vsel %vm112, %v613, %v602
    %v625 = vsel %vm112, %v602, %v605
    %626 = vrot.lane.b32.xlu0 %v544, 1
    %v627 = vpop.permute.xlu0 %626
    %629 = vrot.lane.b32.xlu0 %v539, 1
    %v630 = vpop.permute.xlu0 %629
    %631 = vrot.lane.b32.xlu0 %v540, 1
    %v632 = vpop.permute.xlu0 %631
    %633 = vrot.lane.b32.xlu0 %v541, 1
    %v634 = vpop.permute.xlu0 %633
    %635 = vrot.lane.b32.xlu0 %v542, 1
    %v636 = vpop.permute.xlu0 %635
    %637 = vrot.lane.b32.xlu0 %v543, 1
    %v638 = vpop.permute.xlu0 %637
    %v639 = vsel %vm138, %v630, %v632
    %v640 = vsel %vm138, %v632, %v634
    %v641 = vsel %vm138, %v634, %v636
    %v642 = vsel %vm138, %v636, %v638
    %v643 = vsel %vm138, %v638, %v627
    %v650 = vsel %vm138, %v627, %v630
    %651 = vrot.lane.b32.xlu0 %v539, 127
    %v652 = vpop.permute.xlu0 %651
    %653 = vrot.lane.b32.xlu0 %v540, 127
    %v654 = vpop.permute.xlu0 %653
    %655 = vrot.lane.b32.xlu0 %v541, 127
    %v656 = vpop.permute.xlu0 %655
    %657 = vrot.lane.b32.xlu0 %v542, 127
    %v658 = vpop.permute.xlu0 %657
    %659 = vrot.lane.b32.xlu0 %v543, 127
    %v660 = vpop.permute.xlu0 %659
    %661 = vrot.lane.b32.xlu0 %v544, 127
    %v662 = vpop.permute.xlu0 %661
    %v663 = vsel %vm163, %v652, %v654
    %v664 = vsel %vm163, %v654, %v656
    %v665 = vsel %vm163, %v656, %v658
    %v666 = vsel %vm163, %v658, %v660
    %v667 = vsel %vm163, %v660, %v662
    %v675 = vsel %vm163, %v662, %v652
    %676 = vrot.lane.b32.xlu0 %v539, 111
    %v677 = vpop.permute.xlu0 %676
    %678 = vrot.lane.b32.xlu0 %v540, 111
    %v679 = vpop.permute.xlu0 %678
    %680 = vrot.lane.b32.xlu0 %v541, 111
    %v681 = vpop.permute.xlu0 %680
    %682 = vrot.lane.b32.xlu0 %v542, 111
    %v683 = vpop.permute.xlu0 %682
    %684 = vrot.lane.b32.xlu0 %v543, 111
    %v685 = vpop.permute.xlu0 %684
    %686 = vrot.lane.b32.xlu0 %v544, 111
    %v687 = vpop.permute.xlu0 %686
    %v688 = vsel %vm189, %v677, %v679
    %v689 = vsel %vm189, %v679, %v681
    %v690 = vsel %vm189, %v681, %v683
    %v691 = vsel %vm189, %v683, %v685
    %v692 = vsel %vm189, %v685, %v687
    %v700 = vsel %vm189, %v687, %v677
    %701 = vrot.lane.b32.xlu0 %v539, 110
    %v702 = vpop.permute.xlu0 %701
    %703 = vrot.lane.b32.xlu0 %v540, 110
    %v704 = vpop.permute.xlu0 %703
    %705 = vrot.lane.b32.xlu0 %v541, 110
    %v706 = vpop.permute.xlu0 %705
    %707 = vrot.lane.b32.xlu0 %v542, 110
    %v708 = vpop.permute.xlu0 %707
    %709 = vrot.lane.b32.xlu0 %v543, 110
    %v710 = vpop.permute.xlu0 %709
    %711 = vrot.lane.b32.xlu0 %v544, 110
    %v712 = vpop.permute.xlu0 %711
    %v713 = vsel %vm215, %v702, %v704
    %v714 = vsel %vm215, %v704, %v706
    %v715 = vsel %vm215, %v706, %v708
    %v716 = vsel %vm215, %v708, %v710
    %v717 = vsel %vm215, %v710, %v712
    %v725 = vsel %vm215, %v712, %v702
    %726 = vrot.lane.b32.xlu0 %v539, 109
    %v727 = vpop.permute.xlu0 %726
    %728 = vrot.lane.b32.xlu0 %v540, 109
    %v729 = vpop.permute.xlu0 %728
    %730 = vrot.lane.b32.xlu0 %v541, 109
    %v731 = vpop.permute.xlu0 %730
    %732 = vrot.lane.b32.xlu0 %v542, 109
    %v733 = vpop.permute.xlu0 %732
    %734 = vrot.lane.b32.xlu0 %v543, 109
    %v735 = vpop.permute.xlu0 %734
    %736 = vrot.lane.b32.xlu0 %v544, 109
    %v737 = vpop.permute.xlu0 %736
    %v738 = vsel %vm241, %v727, %v729
    %v739 = vsel %vm241, %v729, %v731
    %v740 = vsel %vm241, %v731, %v733
    %v741 = vsel %vm241, %v733, %v735
    %v742 = vsel %vm241, %v735, %v737
    %v750 = vsel %vm241, %v737, %v727
    %v751 = vld [vmem:[%s5] sm:$0xf]
    %v752 = vpack.c.bf16 %v600, %v575
    %v753 = vpack.c.bf16 %v589, %v564
    %v754 = vpack.c.bf16 %v590, %v565
    %v755 = vpack.c.bf16 %v591, %v566
    %v756 = vpack.c.bf16 %v592, %v567
    %v757 = vpack.c.bf16 %v593, %v568
    %v758 = vpack.c.bf16 %v650, %v625
    %v759 = vpack.c.bf16 %v639, %v614
    %v760 = vpack.c.bf16 %v640, %v615
    %v761 = vpack.c.bf16 %v641, %v616
    %v762 = vpack.c.bf16 %v642, %v617
    %v763 = vpack.c.bf16 %v643, %v618
    %v764 = vpack.c.bf16 %v663, %v539
    %v765 = vpack.c.bf16 %v664, %v540
    %v766 = vpack.c.bf16 %v665, %v541
    %v767 = vpack.c.bf16 %v666, %v542
    %v768 = vpack.c.bf16 %v667, %v543
    %v769 = vpack.c.bf16 %v675, %v544
    %v770 = vpack.c.bf16 %v713, %v688
    %v771 = vpack.c.bf16 %v714, %v689
    %v772 = vpack.c.bf16 %v715, %v690
    %v773 = vpack.c.bf16 %v716, %v691
    %v774 = vpack.c.bf16 %v717, %v692
    %v775 = vpack.c.bf16 %v725, %v700
    %v776 = vpack.c.bf16 %v738, %v738
    %v777 = vpack.c.bf16 %v739, %v739
    %v778 = vpack.c.bf16 %v740, %v740
    %v779 = vpack.c.bf16 %v741, %v741
    %v780 = vpack.c.bf16 %v742, %v742
    %v781 = vpack.c.bf16 %v750, %v750
    %v783 = vsel %vm286, %v751, 0
    %v786 = vsel %vm290, %v776, 0
    %v789 = vsel %vm290, %v777, 0
    %v792 = vsel %vm290, %v778, 0
    %v795 = vsel %vm290, %v779, 0
    %v798 = vsel %vm290, %v780, 0
    %v801 = vsel %vm290, %v781, 0
    %803 = vmatprep.subr.bf16.mxu0 0
    %804 = vmatpush1.bf16.msra.mxu0 0
    %805 = vmatprep.subr.bf16.mxu0 0
    %806 = vmatpush1.bf16.msra.mxu0 0
    %807 = vmatprep.subr.bf16.mxu0 0
    %808 = vmatpush1.bf16.msra.mxu0 0
    %809 = vmatprep.subr.bf16.mxu0 %v789
    %810 = vmatpush1.bf16.msra.mxu0 %v786
    %811 = vmatprep.subr.bf16.mxu0 %v771
    %812 = vmatpush1.bf16.msra.mxu0 %v770
    %813 = vmatprep.subr.bf16.mxu0 %v765
    %814 = vmatpush1.bf16.msra.mxu0 %v764
    %815 = vmatprep.subr.bf16.mxu0 %v759
    %816 = vmatpush1.bf16.msra.mxu0 %v758
    %817 = vmatprep.subr.bf16.mxu0 %v753
    %818 = vmatpush1.bf16.msra.mxu0 %v752
    %819 = vmatprep.subr.bf16.mxu0 0
    %820 = vmatpush2.bf16.msra.mxu0 0
    %821 = vmatprep.subr.bf16.mxu0 0
    %822 = vmatpush2.bf16.msra.mxu0 0
    %823 = vmatprep.subr.bf16.mxu0 0
    %824 = vmatpush2.bf16.msra.mxu0 0
    %825 = vmatprep.subr.bf16.mxu0 0
    %826 = vmatpush2.bf16.msra.mxu0 0
    %827 = vmatprep.subr.bf16.mxu0 0
    %828 = vmatpush2.bf16.msra.mxu0 0
    %829 = vmatprep.subr.bf16.mxu0 0
    %830 = vmatpush2.bf16.msra.mxu0 0
    %831 = vmatprep.subr.bf16.mxu0 0
    %832 = vmatpush2.bf16.msra.mxu0 0
    %833 = vmatprep.subr.bf16.mxu0 0
    %834 = vmatpush2.bf16.msra.mxu0 0
    %835 = vmatprep.mubr.bf16.mxu0 0
    %836 = vmatmul.mubr.bf16.gmra.mxu0 %v783
    %v837 = vpop.f32.mrf.mxu0
    %v838 = vadd.f32 0.0, %v837
    %v839 = vpop.f32.mrf.mxu0
    %v840 = vadd.f32 0.0, %v839
    %v841 = vpop.f32.mrf.mxu0
    %v842 = vpop.f32.mrf.mxu0
    %843 = vdwg.mxu0
    %844 = vmatprep.subr.bf16.mxu0 0
    %845 = vmatpush1.bf16.msra.mxu0 0
    %846 = vmatprep.subr.bf16.mxu0 0
    %847 = vmatpush1.bf16.msra.mxu0 0
    %848 = vmatprep.subr.bf16.mxu0 0
    %849 = vmatpush1.bf16.msra.mxu0 0
    %850 = vmatprep.subr.bf16.mxu0 %v795
    %851 = vmatpush1.bf16.msra.mxu0 %v792
    %852 = vmatprep.subr.bf16.mxu0 %v773
    %853 = vmatpush1.bf16.msra.mxu0 %v772
    %854 = vmatprep.subr.bf16.mxu0 %v767
    %855 = vmatpush1.bf16.msra.mxu0 %v766
    %856 = vmatprep.subr.bf16.mxu0 %v761
    %857 = vmatpush1.bf16.msra.mxu0 %v760
    %858 = vmatprep.subr.bf16.mxu0 %v755
    %859 = vmatpush1.bf16.msra.mxu0 %v754
    %860 = vmatprep.subr.bf16.mxu0 0
    %861 = vmatpush2.bf16.msra.mxu0 0
    %862 = vmatprep.subr.bf16.mxu0 0
    %863 = vmatpush2.bf16.msra.mxu0 0
    %864 = vmatprep.subr.bf16.mxu0 0
    %865 = vmatpush2.bf16.msra.mxu0 0
    %866 = vmatprep.subr.bf16.mxu0 0
    %867 = vmatpush2.bf16.msra.mxu0 0
    %868 = vmatprep.subr.bf16.mxu0 0
    %869 = vmatpush2.bf16.msra.mxu0 0
    %870 = vmatprep.subr.bf16.mxu0 0
    %871 = vmatpush2.bf16.msra.mxu0 0
    %872 = vmatprep.subr.bf16.mxu0 0
    %873 = vmatpush2.bf16.msra.mxu0 0
    %874 = vmatprep.subr.bf16.mxu0 0
    %875 = vmatpush2.bf16.msra.mxu0 0
    %876 = vmatprep.mubr.bf16.mxu0 0
    %877 = vmatmul.mubr.bf16.gmra.mxu0 %v783
    %v878 = vpop.f32.mrf.mxu0
    %v879 = vadd.f32 0.0, %v878
    %v880 = vpop.f32.mrf.mxu0
    %v881 = vadd.f32 0.0, %v880
    %v882 = vpop.f32.mrf.mxu0
    %v883 = vpop.f32.mrf.mxu0
    %884 = vdwg.mxu0
    %885 = vmatprep.subr.bf16.mxu0 0
    %886 = vmatpush1.bf16.msra.mxu0 0
    %887 = vmatprep.subr.bf16.mxu0 0
    %888 = vmatpush1.bf16.msra.mxu0 0
    %889 = vmatprep.subr.bf16.mxu0 0
    %890 = vmatpush1.bf16.msra.mxu0 0
    %891 = vmatprep.subr.bf16.mxu0 %v801
    %892 = vmatpush1.bf16.msra.mxu0 %v798
    %893 = vmatprep.subr.bf16.mxu0 %v775
    %894 = vmatpush1.bf16.msra.mxu0 %v774
    %895 = vmatprep.subr.bf16.mxu0 %v769
    %896 = vmatpush1.bf16.msra.mxu0 %v768
    %897 = vmatprep.subr.bf16.mxu0 %v763
    %898 = vmatpush1.bf16.msra.mxu0 %v762
    %899 = vmatprep.subr.bf16.mxu0 %v757
    %900 = vmatpush1.bf16.msra.mxu0 %v756
    %901 = vmatprep.subr.bf16.mxu0 0
    %902 = vmatpush2.bf16.msra.mxu0 0
    %903 = vmatprep.subr.bf16.mxu0 0
    %904 = vmatpush2.bf16.msra.mxu0 0
    %905 = vmatprep.subr.bf16.mxu0 0
    %906 = vmatpush2.bf16.msra.mxu0 0
    %907 = vmatprep.subr.bf16.mxu0 0
    %908 = vmatpush2.bf16.msra.mxu0 0
    %909 = vmatprep.subr.bf16.mxu0 0
    %910 = vmatpush2.bf16.msra.mxu0 0
    %911 = vmatprep.subr.bf16.mxu0 0
    %912 = vmatpush2.bf16.msra.mxu0 0
    %913 = vmatprep.subr.bf16.mxu0 0
    %914 = vmatpush2.bf16.msra.mxu0 0
    %915 = vmatprep.subr.bf16.mxu0 0
    %916 = vmatpush2.bf16.msra.mxu0 0
    %917 = vmatprep.mubr.bf16.mxu0 0
    %918 = vmatmul.mubr.bf16.gmra.mxu0 %v783
    %v919 = vpop.f32.mrf.mxu0
    %v920 = vadd.f32 0.0, %v919
    %v921 = vpop.f32.mrf.mxu0
    %v922 = vadd.f32 0.0, %v921
    %v923 = vpop.f32.mrf.mxu0
    %v924 = vpop.f32.mrf.mxu0
    %925 = vdwg.mxu0
    %v926 = vmul.f32 %v838, %v436
    %v927 = vmul.f32 %v840, %v440
    %v928 = vmul.f32 %v879, %v444
    %v929 = vmul.f32 %v881, %v448
    %v930 = vmul.f32 %v920, %v452
    %v931 = vmul.f32 %v922, %v456
    %v932 = vadd.f32 %v926, %v927
    %v933 = vadd.f32 %v932, %v928
    %v934 = vadd.f32 %v933, %v929
    %v935 = vadd.f32 %v934, %v930
    %v936 = vadd.f32 %v935, %v931
    %937 = vadd.xlane.f32.xlu0 %v936
    %v938 = vpop.xlane.xlu0 %937
    %v939 = vmul.f32 %v926, %v926
    %v940 = vmul.f32 %v927, %v927
    %v941 = vmul.f32 %v928, %v928
    %v942 = vmul.f32 %v929, %v929
    %v943 = vmul.f32 %v930, %v930
    %v944 = vmul.f32 %v931, %v931
    %v945 = vadd.f32 %v939, %v940
    %v946 = vadd.f32 %v945, %v941
    %v947 = vadd.f32 %v946, %v942
    %v948 = vadd.f32 %v947, %v943
    %v949 = vadd.f32 %v948, %v944
    %950 = vadd.xlane.f32.xlu0 %v949
    %v951 = vpop.xlane.xlu0 %950
    %v952 = vmul.f32 %v938, %v489
    %v953 = vmul.f32 %v951, %v489
    %v954 = vmul.f32 %v952, %v952
    %v955 = vsub.f32 %v953, %v954
    %v956 = vmax.f32 %v955, 0.0
    %v957 = vsub.f32 %v838, %v952
    %v958 = vsub.f32 %v840, %v952
    %v959 = vsub.f32 %v879, %v952
    %v960 = vsub.f32 %v881, %v952
    %v961 = vsub.f32 %v920, %v952
    %v962 = vsub.f32 %v922, %v952
    %v963 = vadd.f32 %v956, 1e-05
    %v964 = vrsqrt.pop %v963
    %v965 = vmul.f32 %v957, %v964
    %v966 = vmul.f32 %v958, %v964
    %v967 = vmul.f32 %v959, %v964
    %v968 = vmul.f32 %v960, %v964
    %v969 = vmul.f32 %v961, %v964
    %v970 = vmul.f32 %v962, %v964
    %v971 = vld [vmem:[%s6] sm:$0xff]
    %973 = vset.pattern.permute.xlu0 0
    %974 = vperm.xlu0 %973, %v971
    %v975 = vpop.permute.xlu0 %974
    %v977 = vmul.f32 %v965, %v975
    %v978 = vmul.f32 %v966, %v975
    %v979 = vmul.f32 %v967, %v975
    %v980 = vmul.f32 %v968, %v975
    %v981 = vmul.f32 %v969, %v975
    %v982 = vmul.f32 %v970, %v975
    %v983 = vld [vmem:[%s7] sm:$0xff]
    %985 = vset.pattern.permute.xlu0 0
    %986 = vperm.xlu0 %985, %v983
    %v987 = vpop.permute.xlu0 %986
    %v989 = vadd.f32 %v977, %v987
    %v990 = vadd.f32 %v978, %v987
    %v991 = vadd.f32 %v979, %v987
    %v992 = vadd.f32 %v980, %v987
    %v993 = vadd.f32 %v981, %v987
    %v994 = vadd.f32 %v982, %v987
    %v995 = vmax.f32 %v989, 0.0
    %v996 = vmax.f32 %v990, 0.0
    %v997 = vmax.f32 %v991, 0.0
    %v998 = vmax.f32 %v992, 0.0
    %v999 = vmax.f32 %v993, 0.0
    %v1000 = vmax.f32 %v994, 0.0
    %1001 = vst [vmem:[#allocation2] sm:$0xff] %v995
    %1002 = vst [vmem:[#allocation2 + $0x8] sm:$0xff] %v996
    %1003 = vst [vmem:[#allocation2 + $0x10] sm:$0xff] %v997
    %1004 = vst [vmem:[#allocation2 + $0x18] sm:$0xff] %v998
    %1005 = vst [vmem:[#allocation2 + $0x20] sm:$0xff] %v999
    %1006 = vst [vmem:[#allocation2 + $0x28] sm:$0xff] %v1000
    // Predicated region
    $region34: #{tpu_custom_call.1} parent=1 // pred_check
      _
    $region35: #{tpu_custom_call.1} parent=1 // pred_check_branch
      %1008 = sbr.rel (0) target = $region37
    $region36: #{tpu_custom_call.1} parent=1 // pred_region
      %s1010 = ssub.s32 768, 768
      %1011 = vsyncadd [#allocation3], %s1010
      %s1013 = sshll.u32 [#allocation2], 4
      %s1014 = int_to_ptr.vmem [resolvable:$true] %s1013
      %1016 = dma.vmem_to_hbm [thread:$0]  %s1014, 768, %s8, [#allocation3]
    $region37: #{tpu_custom_call.1} parent=1 // pred_fallthru
      _
    // Predicated region
    $region38: #{tpu_custom_call.1} parent=1 // pred_check
      _
    $region39: #{tpu_custom_call.1} parent=1 // pred_check_branch
      %1018 = sbr.rel (0) target = $region41
    $region40: #{tpu_custom_call.1} parent=1 // pred_region
      %1019 = dma.done [#allocation3], 768
    $region41: #{tpu_custom_call.1} parent=1 // pred_fallthru
      _
    %1020 = vsyncpa [#allocation3], 1

</llo_original>
